<compile_context>
chip_gen: v7x
topology: tpu7x:2x2x1
jax: 0.10.0
libtpu: 0.0.40
codegen_flags: <defaults>
</compile_context>

<pallas_src>
import functools
import math

import jax
import jax.numpy as jnp
from jax.experimental import pallas as pl
from jax.experimental.pallas import tpu as pltpu


def _round_up(x, m):
    return pl.cdiv(x, m) * m


def _vmem_bytes(shape, itemsize):
    """Rough VMEM footprint of an array (sublane/lane padded)."""
    shape = tuple(int(d) for d in shape)
    if len(shape) < 2:
        return _round_up((shape[0] if shape else 1) * itemsize, 512)
    lead = 1
    for d in shape[:-2]:
        lead *= d
    return lead * _round_up(shape[-2], 8) * _round_up(shape[-1], 128) * itemsize


# ---------------------------------------------------------------------------
# Kernels
# ---------------------------------------------------------------------------

def _qnet_kernel_fused(s_ref, a_ref, w1_ref, w2_ref, w3_ref, out_ref, *,
                       n_s_pad, n_a_pad, h2):
    """Small hidden widths: both heads fused into one lane-padded block-diag.

    layer1: h = relu(s @ W1[state rows] + a @ W1[action rows] + bias row)
    layer2: h = relu(h @ W2blk + bias row)          (block-diagonal over heads)
    layer3: out[:, 0] = q1, out[:, 1] = q2
    """
    cdt = w1_ref.dtype                    # compute dtype of matmul operands
    s = s_ref[...].astype(cdt)
    a = a_ref[...].astype(cdt)
    kb = n_s_pad + n_a_pad                # 8-aligned bias row index

    h = (jnp.dot(s, w1_ref[0:n_s_pad, :], preferred_element_type=jnp.float32)
         + jnp.dot(a, w1_ref[n_s_pad:kb, :], preferred_element_type=jnp.float32)
         + w1_ref[kb:kb + 1, :])
    h = jnp.maximum(h, 0.0)

    h = (jnp.dot(h.astype(cdt), w2_ref[0:h2, :],
                 preferred_element_type=jnp.float32)
         + w2_ref[h2:h2 + 1, :])
    h = jnp.maximum(h, 0.0)

    out_ref[...] = (jnp.dot(h.astype(cdt), w3_ref[0:h2, :],
                            preferred_element_type=jnp.float32)
                    + w3_ref[h2:h2 + 1, :])


def _qnet_kernel_split(s_ref, a_ref, w1_ref, w2_ref, w3_ref, out_ref, *,
                       n_s_pad, n_a_pad, h):
    """hidden_dim % 128 == 0: per-head layer-2/3 dots (no block-diag waste)."""
    cdt = w1_ref.dtype
    s = s_ref[...].astype(cdt)
    a = a_ref[...].astype(cdt)
    kb = n_s_pad + n_a_pad

    x = (jnp.dot(s, w1_ref[0:n_s_pad, :], preferred_element_type=jnp.float32)
         + jnp.dot(a, w1_ref[n_s_pad:kb, :], preferred_element_type=jnp.float32)
         + w1_ref[kb:kb + 1, :])
    x = jnp.maximum(x, 0.0)

    # h is a multiple of 128 -> lane-aligned halves; per-head (H,H) dots.
    x1 = jnp.maximum(
        jnp.dot(x[:, 0:h].astype(cdt), w2_ref[0, 0:h, :],
                preferred_element_type=jnp.float32) + w2_ref[0, h:h + 1, :],
        0.0)
    x2 = jnp.maximum(
        jnp.dot(x[:, h:2 * h].astype(cdt), w2_ref[1, 0:h, :],
                preferred_element_type=jnp.float32) + w2_ref[1, h:h + 1, :],
        0.0)

    # layer 3: W3 rows [0:h] only feed col 0 (q1), rows [h:2h] only col 1 (q2).
    out_ref[...] = (
        jnp.dot(x1.astype(cdt), w3_ref[0:h, :],
                preferred_element_type=jnp.float32)
        + jnp.dot(x2.astype(cdt), w3_ref[h:2 * h, :],
                  preferred_element_type=jnp.float32)
        + w3_ref[2 * h:2 * h + 1, :])


# ---------------------------------------------------------------------------
# Parameter packing (done ONCE per parameter update, not per forward)
# ---------------------------------------------------------------------------

def pack_params(params, num_inputs, num_actions, hidden_dim, *,
                weights_dtype=jnp.float32):
    """Fuse the 12 PyTorch tensors into 3 packed matrices with bias rows.

    On v6e/v7x pass weights_dtype=jnp.bfloat16 (halves weight DMA/VMEM, native
    MXU precision; f32 accumulation is kept in-kernel) and loosen the
    reference tolerance accordingly.
    """
    H = hidden_dim
    n_s, n_a = num_inputs, num_actions
    n_s_pad = _round_up(n_s, 8)
    n_a_pad = _round_up(n_a, 8)
    split_heads = (H >= 128 and H % 128 == 0)
    w1_cols = 2 * H if split_heads else max(128, _round_up(2 * H, 128))
    k1 = n_s_pad + n_a_pad + 8            # aligned [state | action | bias] rows

    # W1f: cols [0:H]=head1, [H:2H]=head2; rows grouped & 8-aligned per source.
    W1f = jnp.zeros((k1, w1_cols), jnp.float32)
    W1f = W1f.at[0:n_s, 0:H].set(params["w1"][0:n_s])
    W1f = W1f.at[0:n_s, H:2 * H].set(params["w4"][0:n_s])
    W1f = W1f.at[n_s_pad:n_s_pad + n_a, 0:H].set(params["w1"][n_s:n_s + n_a])
    W1f = W1f.at[n_s_pad:n_s_pad + n_a, H:2 * H].set(params["w4"][n_s:n_s + n_a])
    W1f = W1f.at[n_s_pad + n_a_pad, 0:H].set(params["b1"].reshape(-1))
    W1f = W1f.at[n_s_pad + n_a_pad, H:2 * H].set(params["b4"].reshape(-1))

    if split_heads:
        # Per-head (H+8, H) blocks: row H of each block holds the bias.
        W2f = jnp.zeros((2, H + 8, H), jnp.float32)
        W2f = W2f.at[0, 0:H, :].set(params["w2"])
        W2f = W2f.at[0, H, :].set(params["b2"].reshape(-1))
        W2f = W2f.at[1, 0:H, :].set(params["w5"])
        W2f = W2f.at[1, H, :].set(params["b5"].reshape(-1))

        W3f = jnp.zeros((2 * H + 8, 2), jnp.float32)
        W3f = W3f.at[0:H, 0:1].set(params["w3"])
        W3f = W3f.at[H:2 * H, 1:2].set(params["w6"])
        W3f = W3f.at[2 * H, 0].set(params["b3"][0, 0])
        W3f = W3f.at[2 * H, 1].set(params["b6"][0, 0])
    else:
        h2 = w1_cols
        # Block-diagonal (zero padding beyond 2H is mathematically inert).
        W2f = jnp.zeros((h2 + 8, h2), jnp.float32)
        W2f = W2f.at[0:H, 0:H].set(params["w2"])
        W2f = W2f.at[H:2 * H, H:2 * H].set(params["w5"])
        W2f = W2f.at[h2, 0:H].set(params["b2"].reshape(-1))
        W2f = W2f.at[h2, H:2 * H].set(params["b5"].reshape(-1))

        W3f = jnp.zeros((h2 + 8, 2), jnp.float32)
        W3f = W3f.at[0:H, 0:1].set(params["w3"])
        W3f = W3f.at[H:2 * H, 1:2].set(params["w6"])
        W3f = W3f.at[h2, 0].set(params["b3"][0, 0])
        W3f = W3f.at[h2, 1].set(params["b6"][0, 0])

    return {
        "W1": W1f.astype(weights_dtype),
        "W2": W2f.astype(weights_dtype),
        "W3": W3f.astype(weights_dtype),
        "n_s": n_s, "n_a": n_a,
        "n_s_pad": n_s_pad, "n_a_pad": n_a_pad,
        "hidden": H, "split_heads": split_heads,
    }


# ---------------------------------------------------------------------------
# Forward
# ---------------------------------------------------------------------------

def _choose_batch_tile(B, batch_tile):
    bt = min(batch_tile, _round_up(B, 8))
    if B >= 128:
        # >= 2 grid steps so both v7x TensorCores get work (parallel axis),
        # and the last tile isn't mostly padding.
        bt = min(bt, _round_up(pl.cdiv(B, 2), 8))
    return _round_up(max(bt, 8), 8)


def _const_spec(arr):
    nd = arr.ndim
    return pl.BlockSpec(arr.shape, lambda i, _nd=nd: (0,) * _nd)


def qnetwork_forward(state, action, packed, *, batch_tile=2048):
    """state: [B, num_inputs], action: [B, num_actions] -> (q1, q2), each [B, 1]."""
    B, n_s = state.shape
    n_a = action.shape[1]
    assert n_s == packed["n_s"] and n_a == packed["n_a"]
    n_s_pad, n_a_pad = packed["n_s_pad"], packed["n_a_pad"]
    W1f, W2f, W3f = packed["W1"], packed["W2"], packed["W3"]
    H = packed["hidden"]
    split = packed["split_heads"]

    bt = _choose_batch_tile(B, batch_tile)
    B_pad = _round_up(B, bt)

    # one pad per input: batch rows to tile multiple, feature cols to the
    # 8-aligned split-K blocks of W1 (zero cols hit zero weight rows -> inert)
    if B_pad != B or n_s_pad != n_s:
        state = jnp.pad(state, ((0, B_pad - B), (0, n_s_pad - n_s)))
    if B_pad != B or n_a_pad != n_a:
        action = jnp.pad(action, ((0, B_pad - B), (0, n_a_pad - n_a)))

    if split:
        kernel = functools.partial(_qnet_kernel_split,
                                   n_s_pad=n_s_pad, n_a_pad=n_a_pad, h=H)
        mac = (n_s_pad + n_a_pad) * 2 * H + 2 * H * H + 2 * H * 2
    else:
        h2 = W2f.shape[1]
        kernel = functools.partial(_qnet_kernel_fused,
                                   n_s_pad=n_s_pad, n_a_pad=n_a_pad, h2=h2)
        mac = (n_s_pad + n_a_pad) * h2 + h2 * h2 + h2 * 2

    weight_bytes = sum(int(w.size) * w.dtype.itemsize for w in (W1f, W2f, W3f))
    cost = pl.CostEstimate(
        flops=int(2 * B_pad * mac),
        transcendentals=0,
        bytes_accessed=int(state.size * state.dtype.itemsize
                           + action.size * action.dtype.itemsize
                           + weight_bytes + B_pad * 2 * 4))

    # Raise the scoped-VMEM limit only when the (double-buffered) footprint
    # would exceed v5e's 16 MiB default; no effect at small widths.
    weight_vmem = sum(_vmem_bytes(w.shape, w.dtype.itemsize)
                      for w in (W1f, W2f, W3f))
    io_vmem = (_vmem_bytes((bt, n_s_pad), 4) + _vmem_bytes((bt, n_a_pad), 4)
               + _vmem_bytes((bt, 2), 4))
    est_vmem = 2 * (weight_vmem + io_vmem)
    vmem_limit = None
    if est_vmem > 12 * 1024 * 1024:
        vmem_limit = int(min(max(est_vmem * 3 // 2, 32 * 1024 * 1024),
                             56 * 1024 * 1024))

    out = pl.pallas_call(
        kernel,
        out_shape=jax.ShapeDtypeStruct((B_pad, 2), jnp.float32),
        grid_spec=pltpu.PrefetchScalarGridSpec(
            num_scalar_prefetch=0,
            grid=(B_pad // bt,),
            in_specs=[
                pl.BlockSpec((bt, n_s_pad), lambda i: (i, 0)),
                pl.BlockSpec((bt, n_a_pad), lambda i: (i, 0)),
                # weights: full-array blocks, grid-invariant -> DMA'd once
                _const_spec(W1f),
                _const_spec(W2f),
                _const_spec(W3f),
            ],
            out_specs=pl.BlockSpec((bt, 2), lambda i: (i, 0)),
        ),
        compiler_params=pltpu.CompilerParams(
            dimension_semantics=("parallel",),
            vmem_limit_bytes=vmem_limit),
        cost_estimate=cost,
    )(state, action, W1f, W2f, W3f)

    # padded batch rows hold bias values, not zeros -> always slice to B
    q1 = out[:B, 0:1]
    q2 = out[:B, 1:2]
    return q1, q2


# ---------------------------------------------------------------------------
# Init & reference
# ---------------------------------------------------------------------------

def _xavier_uniform(key, fan_in, fan_out):
    # Matches torch.nn.init.xavier_uniform_ with gain=1.
    limit = math.sqrt(6.0 / (fan_in + fan_out))
    # PyTorch weight is [out, in]; we store [in, out] so y = x @ W + b.
    return jax.random.uniform(key, (fan_in, fan_out), jnp.float32,
                              minval=-limit, maxval=limit)


def init_params(key, num_inputs, num_actions, hidden_dim):
    d_in = num_inputs + num_actions
    keys = jax.random.split(key, 6)
    return {
        "w1": _xavier_uniform(keys[0], d_in, hidden_dim),
        "b1": jnp.zeros((1, hidden_dim), jnp.float32),
        "w2": _xavier_uniform(keys[1], hidden_dim, hidden_dim),
        "b2": jnp.zeros((1, hidden_dim), jnp.float32),
        "w3": _xavier_uniform(keys[2], hidden_dim, 1),
        "b3": jnp.zeros((1, 1), jnp.float32),
        "w4": _xavier_uniform(keys[3], d_in, hidden_dim),
        "b4": jnp.zeros((1, hidden_dim), jnp.float32),
        "w5": _xavier_uniform(keys[4], hidden_dim, hidden_dim),
        "b5": jnp.zeros((1, hidden_dim), jnp.float32),
        "w6": _xavier_uniform(keys[5], hidden_dim, 1),
        "b6": jnp.zeros((1, 1), jnp.float32),
    }


def _reference_forward(state, action, params):
    """Pure-JAX reference of the PyTorch forward for correctness checking."""
    xu = jnp.concatenate([state, action], axis=1)
    h1 = jax.nn.relu(xu @ params["w1"] + params["b1"])
    h1 = jax.nn.relu(h1 @ params["w2"] + params["b2"])
    q1 = h1 @ params["w3"] + params["b3"]
    h2 = jax.nn.relu(xu @ params["w4"] + params["b4"])
    h2 = jax.nn.relu(h2 @ params["w5"] + params["b5"])
    q2 = h2 @ params["w6"] + params["b6"]
    return q1, q2


if __name__ == "__main__":
    key = jax.random.PRNGKey(0)

    configs = [
        # (num_inputs, num_actions, hidden_dim, batches, atol)
        (8, 4, 32, (8, 20), 1e-5),     # fused block-diag path, batch padding
        (17, 6, 128, (300,), 1e-4),    # per-head split path, 2-step grid
    ]

    for (n_s, n_a, hidden, batches, atol) in configs:
        k_param, k_data = jax.random.split(jax.random.fold_in(key, hidden))
        params = init_params(k_param, n_s, n_a, hidden)
        packed = pack_params(params, n_s, n_a, hidden)      # pack ONCE, reuse
        fwd = jax.jit(functools.partial(qnetwork_forward, packed=packed))

        for batch in batches:
            ks, ka = jax.random.split(jax.random.fold_in(k_data, batch))
            state = jax.random.normal(ks, (batch, n_s), jnp.float32)
            action = jax.random.normal(ka, (batch, n_a), jnp.float32)

            q1, q2 = fwd(state, action)
            q1 = jax.block_until_ready(q1)
            q2 = jax.block_until_ready(q2)

            r1, r2 = _reference_forward(state, action, params)
            assert q1.shape == (batch, 1) and q2.shape == (batch, 1)
            assert jnp.allclose(q1, r1, atol=atol, rtol=1e-4), "q1 mismatch"
            assert jnp.allclose(q2, r2, atol=atol, rtol=1e-4), "q2 mismatch"

    print("KERNEL_OK")
</pallas_src>

<mosaic_0001>
module attributes {stable_mosaic.version = 11 : i64} {
  func.func @_qnet_kernel_fused(%arg0: i32, %arg1: memref<8x8xf32, #tpu.memory_space<vmem>>, %arg2: memref<8x8xf32, #tpu.memory_space<vmem>>, %arg3: memref<24x128xf32, #tpu.memory_space<vmem>>, %arg4: memref<136x128xf32, #tpu.memory_space<vmem>>, %arg5: memref<136x2xf32, #tpu.memory_space<vmem>>, %arg6: memref<8x2xf32, #tpu.memory_space<vmem>>) attributes {dimension_semantics = [#tpu.dimension_semantics<parallel>], iteration_bounds = array<i64: 1>, scalar_prefetch = 0 : i64, scratch_operands = 0 : i64, tpu.core_type = #tpu.core_type<tc>, window_params = [{transform_indices = @transform_0, window_bounds = array<i64: 8, 8>}, {transform_indices = @transform_1, window_bounds = array<i64: 8, 8>}, {pipeline_mode = #tpu.pipeline_mode<synchronous>, transform_indices = @transform_2, window_bounds = array<i64: 24, 128>}, {pipeline_mode = #tpu.pipeline_mode<synchronous>, transform_indices = @transform_3, window_bounds = array<i64: 136, 128>}, {pipeline_mode = #tpu.pipeline_mode<synchronous>, transform_indices = @transform_4, window_bounds = array<i64: 136, 2>}, {transform_indices = @transform_5, window_bounds = array<i64: 8, 2>}]} {
    %c0 = arith.constant 0 : index
    %c0_0 = arith.constant 0 : index
    %0 = vector.load %arg1[%c0, %c0_0] : memref<8x8xf32, #tpu.memory_space<vmem>>, vector<8x8xf32>
    %c0_1 = arith.constant 0 : index
    %c0_2 = arith.constant 0 : index
    %1 = vector.load %arg2[%c0_1, %c0_2] : memref<8x8xf32, #tpu.memory_space<vmem>>, vector<8x8xf32>
    %c0_3 = arith.constant 0 : index
    %c0_4 = arith.constant 0 : index
    %2 = vector.load %arg3[%c0_3, %c0_4] : memref<24x128xf32, #tpu.memory_space<vmem>>, vector<8x128xf32>
    %cst = arith.constant dense<0.000000e+00> : vector<8x128xf32>
    %3 = tpu.matmul %0, %2, %cst {dimension_numbers = #tpu.dot_dimension_numbers<[1], [0], [0], [1], [0, 0, 1, 1], [], []>} : vector<8x8xf32>, vector<8x128xf32>, vector<8x128xf32> -> vector<8x128xf32>
    %c8 = arith.constant 8 : index
    %c0_5 = arith.constant 0 : index
    %4 = vector.load %arg3[%c8, %c0_5] : memref<24x128xf32, #tpu.memory_space<vmem>>, vector<8x128xf32>
    %cst_6 = arith.constant dense<0.000000e+00> : vector<8x128xf32>
    %5 = tpu.matmul %1, %4, %cst_6 {dimension_numbers = #tpu.dot_dimension_numbers<[1], [0], [0], [1], [0, 0, 1, 1], [], []>} : vector<8x8xf32>, vector<8x128xf32>, vector<8x128xf32> -> vector<8x128xf32>
    %6 = arith.addf %3, %5 : vector<8x128xf32>
    %c16 = arith.constant 16 : index
    %c0_7 = arith.constant 0 : index
    %7 = vector.load %arg3[%c16, %c0_7] : memref<24x128xf32, #tpu.memory_space<vmem>>, vector<1x128xf32>
    %8 = vector.broadcast %7 : vector<1x128xf32> to vector<8x128xf32>
    %9 = arith.addf %6, %8 : vector<8x128xf32>
    %cst_8 = arith.constant 0.000000e+00 : f32
    %10 = vector.broadcast %cst_8 : f32 to vector<8x128xf32>
    %11 = arith.maximumf %9, %10 : vector<8x128xf32>
    %c0_9 = arith.constant 0 : index
    %c0_10 = arith.constant 0 : index
    %12 = vector.load %arg4[%c0_9, %c0_10] : memref<136x128xf32, #tpu.memory_space<vmem>>, vector<128x128xf32>
    %cst_11 = arith.constant dense<0.000000e+00> : vector<8x128xf32>
    %13 = tpu.matmul %11, %12, %cst_11 {dimension_numbers = #tpu.dot_dimension_numbers<[1], [0], [0], [1], [0, 0, 1, 1], [], []>} : vector<8x128xf32>, vector<128x128xf32>, vector<8x128xf32> -> vector<8x128xf32>
    %c128 = arith.constant 128 : index
    %c0_12 = arith.constant 0 : index
    %14 = vector.load %arg4[%c128, %c0_12] : memref<136x128xf32, #tpu.memory_space<vmem>>, vector<1x128xf32>
    %15 = vector.broadcast %14 : vector<1x128xf32> to vector<8x128xf32>
    %16 = arith.addf %13, %15 : vector<8x128xf32>
    %cst_13 = arith.constant 0.000000e+00 : f32
    %17 = vector.broadcast %cst_13 : f32 to vector<8x128xf32>
    %18 = arith.maximumf %16, %17 : vector<8x128xf32>
    %c0_14 = arith.constant 0 : index
    %c0_15 = arith.constant 0 : index
    %19 = vector.load %arg5[%c0_14, %c0_15] : memref<136x2xf32, #tpu.memory_space<vmem>>, vector<128x2xf32>
    %cst_16 = arith.constant dense<0.000000e+00> : vector<8x2xf32>
    %20 = tpu.matmul %18, %19, %cst_16 {dimension_numbers = #tpu.dot_dimension_numbers<[1], [0], [0], [1], [0, 0, 1, 1], [], []>} : vector<8x128xf32>, vector<128x2xf32>, vector<8x2xf32> -> vector<8x2xf32>
    %c128_17 = arith.constant 128 : index
    %c0_18 = arith.constant 0 : index
    %21 = vector.load %arg5[%c128_17, %c0_18] : memref<136x2xf32, #tpu.memory_space<vmem>>, vector<1x2xf32>
    %22 = vector.broadcast %21 : vector<1x2xf32> to vector<8x2xf32>
    %23 = arith.addf %20, %22 : vector<8x2xf32>
    %c0_19 = arith.constant 0 : index
    %c0_20 = arith.constant 0 : index
    %24 = vector.load %arg6[%c0_19, %c0_20] : memref<8x2xf32, #tpu.memory_space<vmem>>, vector<8x2xf32>
    tpu.vector_store %arg6[%c0_19, %c0_20], %23 {strides = array<i32>} : memref<8x2xf32, #tpu.memory_space<vmem>>, vector<8x2xf32>,
    return
  }
  func.func @transform_0(%arg0: i32) -> (i32, i32) {
    %c0_i32 = arith.constant 0 : i32
    %c0_i32_0 = arith.constant 0 : i32
    return %arg0, %c0_i32 : i32, i32
  }
  func.func @transform_1(%arg0: i32) -> (i32, i32) {
    %c0_i32 = arith.constant 0 : i32
    %c0_i32_0 = arith.constant 0 : i32
    return %arg0, %c0_i32 : i32, i32
  }
  func.func @transform_2(%arg0: i32) -> (i32, i32) {
    %c0_i32 = arith.constant 0 : i32
    %c0_i32_0 = arith.constant 0 : i32
    %c0_i32_1 = arith.constant 0 : i32
    return %c0_i32, %c0_i32_0 : i32, i32
  }
  func.func @transform_3(%arg0: i32) -> (i32, i32) {
    %c0_i32 = arith.constant 0 : i32
    %c0_i32_0 = arith.constant 0 : i32
    %c0_i32_1 = arith.constant 0 : i32
    return %c0_i32, %c0_i32_0 : i32, i32
  }
  func.func @transform_4(%arg0: i32) -> (i32, i32) {
    %c0_i32 = arith.constant 0 : i32
    %c0_i32_0 = arith.constant 0 : i32
    %c0_i32_1 = arith.constant 0 : i32
    return %c0_i32, %c0_i32_0 : i32, i32
  }
  func.func @transform_5(%arg0: i32) -> (i32, i32) {
    %c0_i32 = arith.constant 0 : i32
    %c0_i32_0 = arith.constant 0 : i32
    return %arg0, %c0_i32 : i32, i32
  }
}

</mosaic_0001>

<llo_original>
// kernel: qnetwork_forward.1
$region0: #{qnetwork_forward.1}
  #allocation0 [shape = 'u32[]', space=smem, size = 0x4, offset = 0x4, fixed_abs, tag = 'smem constant byte address 0x4 - core index']
  #allocation1 [shape = 'u32[144,128]{1,0:T(1,128)}', space=vmem, size = 0x12000, scoped, tag = 'internal scratch']
  %s0 = inlined_call_operand.vmem [shape: f32[8,8], index: 0, kind: input, shape index: {}]
  %s1 = inlined_call_operand.vmem [shape: f32[8,8], index: 1, kind: input, shape index: {}]
  %s2 = inlined_call_operand.vmem [shape: f32[24,128], index: 2, kind: input, shape index: {}]
  %s3 = inlined_call_operand.hbm [shape: f32[136,128], index: 3, kind: input, shape index: {}]
  %s4 = inlined_call_operand.hbm [shape: f32[136,2], index: 4, kind: input, shape index: {}]
  %s5 = inlined_call_operand.vmem [shape: f32[8,2], index: 5, kind: output, shape index: {}]
  %s6 = sld [smem:[#allocation0]]
  $region38: #{qnetwork_forward.1} parent=0
    _
  %s8 = ssub.s32 1, %s6
  %s9 = scalar_select 0, %s8, %s6
  $region1: #{qnetwork_forward.1} parent=0
    #allocation2 [shape = 'u8[69632]{0}', space=vmem, size = 0x11000, scoped, tag = 'input window, operand 3, single buffered']
    #allocation3 [shape = 's32[1]{0}', space=sflag, size = 0x4, scoped, tag = 'scoped memory for qnetwork_forward.1']
    #allocation4 [shape = 'u8[69632]{0}', space=vmem, size = 0x11000, scoped, tag = 'input window, operand 4, single buffered']
    #allocation5 [shape = 's32[1]{0}', space=sflag, size = 0x4, scoped, tag = 'scoped memory for qnetwork_forward.1']
    %10 = vsyncpa [#allocation3], 0
    %11 = vsyncpa [#allocation5], 0
    // Predicated region
    $region2: #{qnetwork_forward.1} parent=1 // pred_check
      _
    $region3: #{qnetwork_forward.1} parent=1 // pred_check_branch
      %13 = sbr.rel (0) target = $region5
    $region4: #{qnetwork_forward.1} parent=1 // pred_region
      _
    $region5: #{qnetwork_forward.1} parent=1 // pred_fallthru
      _
    // Predicated region
    $region6: #{qnetwork_forward.1} parent=1 // pred_check
      _
    $region7: #{qnetwork_forward.1} parent=1 // pred_check_branch
      %15 = sbr.rel (0) target = $region9
    $region8: #{qnetwork_forward.1} parent=1 // pred_region
      _
    $region9: #{qnetwork_forward.1} parent=1 // pred_fallthru
      _
    // Predicated region
    $region10: #{qnetwork_forward.1} parent=1 // pred_check
      _
    $region11: #{qnetwork_forward.1} parent=1 // pred_check_branch
      %17 = sbr.rel (0) target = $region13
    $region12: #{qnetwork_forward.1} parent=1 // pred_region
      _
    $region13: #{qnetwork_forward.1} parent=1 // pred_fallthru
      _
    // Predicated region
    $region14: #{qnetwork_forward.1} parent=1 // pred_check
      _
    $region15: #{qnetwork_forward.1} parent=1 // pred_check_branch
      %19 = sbr.rel (0) target = $region17
    $region16: #{qnetwork_forward.1} parent=1 // pred_region
      %s21 = ssub.s32 2176, 2176
      %22 = vsyncadd [#allocation3], %s21
      %s23 = sshll.u32 [#allocation2], 4
      %s24 = int_to_ptr.vmem [resolvable:$true] %s23
      %29 = dma.hbm_to_vmem [thread:$0]  %s3, 2176, %s24, [#allocation3], 128, 128, 8
    $region17: #{qnetwork_forward.1} parent=1 // pred_fallthru
      _
    // Predicated region
    $region18: #{qnetwork_forward.1} parent=1 // pred_check
      _
    $region19: #{qnetwork_forward.1} parent=1 // pred_check_branch
      %31 = sbr.rel (0) target = $region21
    $region20: #{qnetwork_forward.1} parent=1 // pred_region
      %s33 = ssub.s32 2176, 2176
      %34 = vsyncadd [#allocation5], %s33
      %s35 = sshll.u32 [#allocation4], 4
      %s36 = int_to_ptr.vmem [resolvable:$true] %s35
      %41 = dma.hbm_to_vmem [thread:$0]  %s4, 2176, %s36, [#allocation5], 128, 128, 8
    $region21: #{qnetwork_forward.1} parent=1 // pred_fallthru
      _
    // Predicated region
    $region22: #{qnetwork_forward.1} parent=1 // pred_check
      _
    $region23: #{qnetwork_forward.1} parent=1 // pred_check_branch
      %43 = sbr.rel (0) target = $region25
    $region24: #{qnetwork_forward.1} parent=1 // pred_region
      %44 = dma.done [#allocation3], 2176
    $region25: #{qnetwork_forward.1} parent=1 // pred_fallthru
      _
    // Predicated region
    $region26: #{qnetwork_forward.1} parent=1 // pred_check
      _
    $region27: #{qnetwork_forward.1} parent=1 // pred_check_branch
      %46 = sbr.rel (0) target = $region29
    $region28: #{qnetwork_forward.1} parent=1 // pred_region
      %47 = dma.done [#allocation5], 2176
    $region29: #{qnetwork_forward.1} parent=1 // pred_fallthru
      _
    %v48 = vld [vmem:[%s0] sm:$0xff]
    %v49 = vld [vmem:[%s1] sm:$0xff]
    %v50 = vld [vmem:[%s2] sm:$0xff]
    %v51 = vld [vmem:[%s2 + $0x8] sm:$0xff]
    %vm52 = vcmask 64512
    %v54 = vsel %vm52, %v49, 0
    %56 = vmatprep.subr.mxu0 0.0
    %57 = vmatpush1.msra.mxu0 %v51
    %58 = vmatprep.subr.mxu0 0.0
    %59 = vmatpush1.msra.mxu0 0.0
    %60 = vmatprep.subr.mxu0 0.0
    %61 = vmatpush1.msra.mxu0 0.0
    %62 = vmatprep.subr.mxu0 0.0
    %63 = vmatpush1.msra.mxu0 0.0
    %64 = vmatprep.subr.mxu0 0.0
    %65 = vmatpush1.msra.mxu0 0.0
    %66 = vmatprep.subr.mxu0 0.0
    %67 = vmatpush1.msra.mxu0 0.0
    %68 = vmatprep.subr.mxu0 0.0
    %69 = vmatpush1.msra.mxu0 0.0
    %70 = vmatprep.subr.mxu0 0.0
    %71 = vmatpush1.msra.mxu0 0.0
    %72 = vmatprep.subr.mxu0 0.0
    %73 = vmatpush1.msra.mxu0 0.0
    %74 = vmatprep.subr.mxu0 0.0
    %75 = vmatpush1.msra.mxu0 0.0
    %76 = vmatprep.subr.mxu0 0.0
    %77 = vmatpush1.msra.mxu0 0.0
    %78 = vmatprep.subr.mxu0 0.0
    %79 = vmatpush1.msra.mxu0 0.0
    %80 = vmatprep.subr.mxu0 0.0
    %81 = vmatpush1.msra.mxu0 0.0
    %82 = vmatprep.subr.mxu0 0.0
    %83 = vmatpush1.msra.mxu0 0.0
    %84 = vmatprep.subr.mxu0 0.0
    %85 = vmatpush1.msra.mxu0 0.0
    %86 = vmatprep.subr.mxu0 0.0
    %87 = vmatpush1.msra.mxu0 0.0
    %88 = vmatprep.subr.mxu0 0.0
    %89 = vmatpush1.msra.mxu0 0.0
    %90 = vmatprep.subr.mxu0 0.0
    %91 = vmatpush1.msra.mxu0 0.0
    %92 = vmatprep.subr.mxu0 0.0
    %93 = vmatpush1.msra.mxu0 0.0
    %94 = vmatprep.subr.mxu0 0.0
    %95 = vmatpush1.msra.mxu0 0.0
    %96 = vmatprep.subr.mxu0 0.0
    %97 = vmatpush1.msra.mxu0 0.0
    %98 = vmatprep.subr.mxu0 0.0
    %99 = vmatpush1.msra.mxu0 0.0
    %100 = vmatprep.subr.mxu0 0.0
    %101 = vmatpush1.msra.mxu0 0.0
    %102 = vmatprep.subr.mxu0 0.0
    %103 = vmatpush1.msra.mxu0 0.0
    %104 = vmatprep.subr.mxu0 0.0
    %105 = vmatpush1.msra.mxu0 0.0
    %106 = vmatprep.subr.mxu0 0.0
    %107 = vmatpush1.msra.mxu0 0.0
    %108 = vmatprep.subr.mxu0 0.0
    %109 = vmatpush1.msra.mxu0 0.0
    %110 = vmatprep.subr.mxu0 0.0
    %111 = vmatpush1.msra.mxu0 0.0
    %112 = vmatprep.subr.mxu0 0.0
    %113 = vmatpush1.msra.mxu0 0.0
    %114 = vmatprep.subr.mxu0 0.0
    %115 = vmatpush1.msra.mxu0 0.0
    %116 = vmatprep.subr.mxu0 0.0
    %117 = vmatpush1.msra.mxu0 0.0
    %118 = vmatprep.subr.mxu0 0.0
    %119 = vmatpush1.msra.mxu0 0.0
    %120 = vmatprep.mubr.f32.mxu0 0.0
    %121 = vmatmul.mubr.f32.gmra.mrb[0].mxu0 %v54
    %v122 = vpop.f32.mrb[0].mxu0
    %v123 = vadd.f32 0.0, %v122
    %v124 = vpop.f32.mrb[0].mxu0
    %125 = vdwg.mxu0
    %v127 = vsel %vm52, %v48, 0
    %129 = vmatprep.subr.mxu0 0.0
    %130 = vmatpush1.msra.mxu0 %v50
    %131 = vmatprep.subr.mxu0 0.0
    %132 = vmatpush1.msra.mxu0 0.0
    %133 = vmatprep.subr.mxu0 0.0
    %134 = vmatpush1.msra.mxu0 0.0
    %135 = vmatprep.subr.mxu0 0.0
    %136 = vmatpush1.msra.mxu0 0.0
    %137 = vmatprep.subr.mxu0 0.0
    %138 = vmatpush1.msra.mxu0 0.0
    %139 = vmatprep.subr.mxu0 0.0
    %140 = vmatpush1.msra.mxu0 0.0
    %141 = vmatprep.subr.mxu0 0.0
    %142 = vmatpush1.msra.mxu0 0.0
    %143 = vmatprep.subr.mxu0 0.0
    %144 = vmatpush1.msra.mxu0 0.0
    %145 = vmatprep.subr.mxu0 0.0
    %146 = vmatpush1.msra.mxu0 0.0
    %147 = vmatprep.subr.mxu0 0.0
    %148 = vmatpush1.msra.mxu0 0.0
    %149 = vmatprep.subr.mxu0 0.0
    %150 = vmatpush1.msra.mxu0 0.0
    %151 = vmatprep.subr.mxu0 0.0
    %152 = vmatpush1.msra.mxu0 0.0
    %153 = vmatprep.subr.mxu0 0.0
    %154 = vmatpush1.msra.mxu0 0.0
    %155 = vmatprep.subr.mxu0 0.0
    %156 = vmatpush1.msra.mxu0 0.0
    %157 = vmatprep.subr.mxu0 0.0
    %158 = vmatpush1.msra.mxu0 0.0
    %159 = vmatprep.subr.mxu0 0.0
    %160 = vmatpush1.msra.mxu0 0.0
    %161 = vmatprep.subr.mxu0 0.0
    %162 = vmatpush1.msra.mxu0 0.0
    %163 = vmatprep.subr.mxu0 0.0
    %164 = vmatpush1.msra.mxu0 0.0
    %165 = vmatprep.subr.mxu0 0.0
    %166 = vmatpush1.msra.mxu0 0.0
    %167 = vmatprep.subr.mxu0 0.0
    %168 = vmatpush1.msra.mxu0 0.0
    %169 = vmatprep.subr.mxu0 0.0
    %170 = vmatpush1.msra.mxu0 0.0
    %171 = vmatprep.subr.mxu0 0.0
    %172 = vmatpush1.msra.mxu0 0.0
    %173 = vmatprep.subr.mxu0 0.0
    %174 = vmatpush1.msra.mxu0 0.0
    %175 = vmatprep.subr.mxu0 0.0
    %176 = vmatpush1.msra.mxu0 0.0
    %177 = vmatprep.subr.mxu0 0.0
    %178 = vmatpush1.msra.mxu0 0.0
    %179 = vmatprep.subr.mxu0 0.0
    %180 = vmatpush1.msra.mxu0 0.0
    %181 = vmatprep.subr.mxu0 0.0
    %182 = vmatpush1.msra.mxu0 0.0
    %183 = vmatprep.subr.mxu0 0.0
    %184 = vmatpush1.msra.mxu0 0.0
    %185 = vmatprep.subr.mxu0 0.0
    %186 = vmatpush1.msra.mxu0 0.0
    %187 = vmatprep.subr.mxu0 0.0
    %188 = vmatpush1.msra.mxu0 0.0
    %189 = vmatprep.subr.mxu0 0.0
    %190 = vmatpush1.msra.mxu0 0.0
    %191 = vmatprep.subr.mxu0 0.0
    %192 = vmatpush1.msra.mxu0 0.0
    %193 = vmatprep.mubr.f32.mxu0 0.0
    %194 = vmatmul.mubr.f32.gmra.mrb[0].mxu0 %v127
    %v195 = vpop.f32.mrb[0].mxu0
    %v196 = vadd.f32 %v123, %v195
    %v197 = vpop.f32.mrb[0].mxu0
    %198 = vdwg.mxu0
    %v199 = vld [vmem:[%s2 + $0x10] sm:$0x1]
    %v200 = vlaneseq
    %v201 = vshrl.u32 %v200, 7
    %v202 = vsub.s32 0, %v201
    %v203 = vrot.slane %v199, %v202
    %v204 = vadd.f32 %v196, %v203
    %v205 = vmax.f32 %v204, 0.0
    %v206 = vld [vmem:[#allocation2] sm:$0xff]
    %v207 = vld [vmem:[#allocation2 + $0x8] sm:$0xff]
    %v208 = vld [vmem:[#allocation2 + $0x10] sm:$0xff]
    %v209 = vld [vmem:[#allocation2 + $0x18] sm:$0xff]
    %v210 = vld [vmem:[#allocation2 + $0x20] sm:$0xff]
    %v211 = vld [vmem:[#allocation2 + $0x28] sm:$0xff]
    %v212 = vld [vmem:[#allocation2 + $0x30] sm:$0xff]
    %v213 = vld [vmem:[#allocation2 + $0x38] sm:$0xff]
    %v214 = vld [vmem:[#allocation2 + $0x40] sm:$0xff]
    %v215 = vld [vmem:[#allocation2 + $0x48] sm:$0xff]
    %v216 = vld [vmem:[#allocation2 + $0x50] sm:$0xff]
    %v217 = vld [vmem:[#allocation2 + $0x58] sm:$0xff]
    %v218 = vld [vmem:[#allocation2 + $0x60] sm:$0xff]
    %v219 = vld [vmem:[#allocation2 + $0x68] sm:$0xff]
    %v220 = vld [vmem:[#allocation2 + $0x70] sm:$0xff]
    %v221 = vld [vmem:[#allocation2 + $0x78] sm:$0xff]
    %v222 = vld [vmem:[#allocation2 + $0x80] sm:$0x1]
    %v223 = vlaneseq
    %v224 = vshrl.u32 %v223, 7
    %v225 = vsub.s32 0, %v224
    %v226 = vrot.slane %v222, %v225
    %227 = vmatprep.subr.mxu0 0.0
    %228 = vmatpush1.msra.mxu0 %v206
    %229 = vmatprep.subr.mxu0 0.0
    %230 = vmatpush1.msra.mxu0 %v207
    %231 = vmatprep.subr.mxu0 0.0
    %232 = vmatpush1.msra.mxu0 %v208
    %233 = vmatprep.subr.mxu0 0.0
    %234 = vmatpush1.msra.mxu0 %v209
    %235 = vmatprep.subr.mxu0 0.0
    %236 = vmatpush1.msra.mxu0 %v210
    %237 = vmatprep.subr.mxu0 0.0
    %238 = vmatpush1.msra.mxu0 %v211
    %239 = vmatprep.subr.mxu0 0.0
    %240 = vmatpush1.msra.mxu0 %v212
    %241 = vmatprep.subr.mxu0 0.0
    %242 = vmatpush1.msra.mxu0 %v213
    %243 = vmatprep.subr.mxu0 0.0
    %244 = vmatpush1.msra.mxu0 %v214
    %245 = vmatprep.subr.mxu0 0.0
    %246 = vmatpush1.msra.mxu0 %v215
    %247 = vmatprep.subr.mxu0 0.0
    %248 = vmatpush1.msra.mxu0 %v216
    %249 = vmatprep.subr.mxu0 0.0
    %250 = vmatpush1.msra.mxu0 %v217
    %251 = vmatprep.subr.mxu0 0.0
    %252 = vmatpush1.msra.mxu0 %v218
    %253 = vmatprep.subr.mxu0 0.0
    %254 = vmatpush1.msra.mxu0 %v219
    %255 = vmatprep.subr.mxu0 0.0
    %256 = vmatpush1.msra.mxu0 %v220
    %257 = vmatprep.subr.mxu0 0.0
    %258 = vmatpush1.msra.mxu0 %v221
    %259 = vmatprep.subr.mxu0 0.0
    %260 = vmatpush1.msra.mxu0 0.0
    %261 = vmatprep.subr.mxu0 0.0
    %262 = vmatpush1.msra.mxu0 0.0
    %263 = vmatprep.subr.mxu0 0.0
    %264 = vmatpush1.msra.mxu0 0.0
    %265 = vmatprep.subr.mxu0 0.0
    %266 = vmatpush1.msra.mxu0 0.0
    %267 = vmatprep.subr.mxu0 0.0
    %268 = vmatpush1.msra.mxu0 0.0
    %269 = vmatprep.subr.mxu0 0.0
    %270 = vmatpush1.msra.mxu0 0.0
    %271 = vmatprep.subr.mxu0 0.0
    %272 = vmatpush1.msra.mxu0 0.0
    %273 = vmatprep.subr.mxu0 0.0
    %274 = vmatpush1.msra.mxu0 0.0
    %275 = vmatprep.subr.mxu0 0.0
    %276 = vmatpush1.msra.mxu0 0.0
    %277 = vmatprep.subr.mxu0 0.0
    %278 = vmatpush1.msra.mxu0 0.0
    %279 = vmatprep.subr.mxu0 0.0
    %280 = vmatpush1.msra.mxu0 0.0
    %281 = vmatprep.subr.mxu0 0.0
    %282 = vmatpush1.msra.mxu0 0.0
    %283 = vmatprep.subr.mxu0 0.0
    %284 = vmatpush1.msra.mxu0 0.0
    %285 = vmatprep.subr.mxu0 0.0
    %286 = vmatpush1.msra.mxu0 0.0
    %287 = vmatprep.subr.mxu0 0.0
    %288 = vmatpush1.msra.mxu0 0.0
    %289 = vmatprep.subr.mxu0 0.0
    %290 = vmatpush1.msra.mxu0 0.0
    %291 = vmatprep.mubr.f32.mxu0 0.0
    %292 = vmatmul.mubr.f32.gmra.mrb[0].mxu0 %v205
    %v293 = vpop.f32.mrb[0].mxu0
    %v294 = vadd.f32 %v226, %v293
    %v295 = vpop.f32.mrb[0].mxu0
    %296 = vdwg.mxu0
    %v297 = vmax.f32 %v294, 0.0
    %v298 = vld [vmem:[#allocation4] sm:$0xff]
    %v299 = vld [vmem:[#allocation4 + $0x8] sm:$0xff]
    %v300 = vld [vmem:[#allocation4 + $0x10] sm:$0xff]
    %v301 = vld [vmem:[#allocation4 + $0x18] sm:$0xff]
    %v302 = vld [vmem:[#allocation4 + $0x20] sm:$0xff]
    %v303 = vld [vmem:[#allocation4 + $0x28] sm:$0xff]
    %v304 = vld [vmem:[#allocation4 + $0x30] sm:$0xff]
    %v305 = vld [vmem:[#allocation4 + $0x38] sm:$0xff]
    %v306 = vld [vmem:[#allocation4 + $0x40] sm:$0xff]
    %v307 = vld [vmem:[#allocation4 + $0x48] sm:$0xff]
    %v308 = vld [vmem:[#allocation4 + $0x50] sm:$0xff]
    %v309 = vld [vmem:[#allocation4 + $0x58] sm:$0xff]
    %v310 = vld [vmem:[#allocation4 + $0x60] sm:$0xff]
    %v311 = vld [vmem:[#allocation4 + $0x68] sm:$0xff]
    %v312 = vld [vmem:[#allocation4 + $0x70] sm:$0xff]
    %v313 = vld [vmem:[#allocation4 + $0x78] sm:$0xff]
    %v314 = vld [vmem:[#allocation4 + $0x80] sm:$0x1]
    %v315 = vlaneseq
    %v316 = vshrl.u32 %v315, 7
    %v317 = vsub.s32 0, %v316
    %v318 = vrot.slane %v314, %v317
    %319 = vmatprep.subr.mxu0 0.0
    %320 = vmatpush1.msra.mxu0 %v298
    %321 = vmatprep.subr.mxu0 0.0
    %322 = vmatpush1.msra.mxu0 %v299
    %323 = vmatprep.subr.mxu0 0.0
    %324 = vmatpush1.msra.mxu0 %v300
    %325 = vmatprep.subr.mxu0 0.0
    %326 = vmatpush1.msra.mxu0 %v301
    %327 = vmatprep.subr.mxu0 0.0
    %328 = vmatpush1.msra.mxu0 %v302
    %329 = vmatprep.subr.mxu0 0.0
    %330 = vmatpush1.msra.mxu0 %v303
    %331 = vmatprep.subr.mxu0 0.0
    %332 = vmatpush1.msra.mxu0 %v304
    %333 = vmatprep.subr.mxu0 0.0
    %334 = vmatpush1.msra.mxu0 %v305
    %335 = vmatprep.subr.mxu0 0.0
    %336 = vmatpush1.msra.mxu0 %v306
    %337 = vmatprep.subr.mxu0 0.0
    %338 = vmatpush1.msra.mxu0 %v307
    %339 = vmatprep.subr.mxu0 0.0
    %340 = vmatpush1.msra.mxu0 %v308
    %341 = vmatprep.subr.mxu0 0.0
    %342 = vmatpush1.msra.mxu0 %v309
    %343 = vmatprep.subr.mxu0 0.0
    %344 = vmatpush1.msra.mxu0 %v310
    %345 = vmatprep.subr.mxu0 0.0
    %346 = vmatpush1.msra.mxu0 %v311
    %347 = vmatprep.subr.mxu0 0.0
    %348 = vmatpush1.msra.mxu0 %v312
    %349 = vmatprep.subr.mxu0 0.0
    %350 = vmatpush1.msra.mxu0 %v313
    %351 = vmatprep.subr.mxu0 0.0
    %352 = vmatpush1.msra.mxu0 0.0
    %353 = vmatprep.subr.mxu0 0.0
    %354 = vmatpush1.msra.mxu0 0.0
    %355 = vmatprep.subr.mxu0 0.0
    %356 = vmatpush1.msra.mxu0 0.0
    %357 = vmatprep.subr.mxu0 0.0
    %358 = vmatpush1.msra.mxu0 0.0
    %359 = vmatprep.subr.mxu0 0.0
    %360 = vmatpush1.msra.mxu0 0.0
    %361 = vmatprep.subr.mxu0 0.0
    %362 = vmatpush1.msra.mxu0 0.0
    %363 = vmatprep.subr.mxu0 0.0
    %364 = vmatpush1.msra.mxu0 0.0
    %365 = vmatprep.subr.mxu0 0.0
    %366 = vmatpush1.msra.mxu0 0.0
    %367 = vmatprep.subr.mxu0 0.0
    %368 = vmatpush1.msra.mxu0 0.0
    %369 = vmatprep.subr.mxu0 0.0
    %370 = vmatpush1.msra.mxu0 0.0
    %371 = vmatprep.subr.mxu0 0.0
    %372 = vmatpush1.msra.mxu0 0.0
    %373 = vmatprep.subr.mxu0 0.0
    %374 = vmatpush1.msra.mxu0 0.0
    %375 = vmatprep.subr.mxu0 0.0
    %376 = vmatpush1.msra.mxu0 0.0
    %377 = vmatprep.subr.mxu0 0.0
    %378 = vmatpush1.msra.mxu0 0.0
    %379 = vmatprep.subr.mxu0 0.0
    %380 = vmatpush1.msra.mxu0 0.0
    %381 = vmatprep.subr.mxu0 0.0
    %382 = vmatpush1.msra.mxu0 0.0
    %383 = vmatprep.mubr.f32.mxu0 0.0
    %384 = vmatmul.mubr.f32.gmra.mrb[0].mxu0 %v297
    %v385 = vpop.f32.mrb[0].mxu0
    %v386 = vadd.f32 %v318, %v385
    %v387 = vpop.f32.mrb[0].mxu0
    %388 = vdwg.mxu0
    %vm389 = vcmask 15360
    %390 = vst.msk [vmem:[%s5] sm:$0xff] %vm389, %v386
    // Predicated region
    $region30: #{qnetwork_forward.1} parent=1 // pred_check
      _
    $region31: #{qnetwork_forward.1} parent=1 // pred_check_branch
      %392 = sbr.rel (0) target = $region33
    $region32: #{qnetwork_forward.1} parent=1 // pred_region
      _
    $region33: #{qnetwork_forward.1} parent=1 // pred_fallthru
      _
    // Predicated region
    $region34: #{qnetwork_forward.1} parent=1 // pred_check
      _
    $region35: #{qnetwork_forward.1} parent=1 // pred_check_branch
      %394 = sbr.rel (0) target = $region37
    $region36: #{qnetwork_forward.1} parent=1 // pred_region
      _
    $region37: #{qnetwork_forward.1} parent=1 // pred_fallthru
      _
    %395 = vsyncpa [#allocation3], 1
    %396 = vsyncpa [#allocation5], 1

</llo_original>
